<compile_context>
chip_gen: v7x
topology: tpu7x:2x2x1
jax: 0.10.0
libtpu: 0.0.40
codegen_flags: <defaults>
</compile_context>

<pallas_src>
import jax
import jax.numpy as jnp
from jax.experimental import pallas as pl
from jax.experimental.pallas import tpu as pltpu

_LANES = 512        # slab width: multiple of 128 -> lane-dense, unmasked stores
_TILE_ROWS = 512    # tile height: multiple of 8; (512, 512) f32 = 1 MiB / buffer


def _logreg_kernel(w_ref, b_ref, x_ref, o_ref):
    # w_ref / b_ref: SMEM scalars ([1] f32); x_ref / o_ref: (tr, _LANES) VMEM tiles.
    w = w_ref[0]
    b = b_ref[0]
    z = x_ref[...] * w + b          # Linear(1, 1): x * W[0, 0] + b[0]
    o_ref[...] = jax.nn.sigmoid(z)  # exp + reciprocal on the EUP slot, stable


def logistic_regression(x, weight, bias, *, tile_rows=_TILE_ROWS):
    """x: [..., 1] float; weight: [1, 1]; bias: [1] -> sigmoid(x @ W^T + b)."""
    orig_shape = x.shape
    orig_dtype = x.dtype

    xf = jnp.reshape(x, (-1,)).astype(jnp.float32)
    n = xf.shape[0]

    # Lane-dense slab: [rows, _LANES], rows a multiple of the tile height.
    rows = pl.cdiv(n, _LANES)
    rows = ((rows + 7) // 8) * 8                      # sublane (8) multiple
    tr = max(8, (min(tile_rows, rows) // 8) * 8)      # tile height, mult. of 8
    padded_rows = ((rows + tr - 1) // tr) * tr
    padded_n = padded_rows * _LANES
    if padded_n != n:
        xf = jnp.pad(xf, (0, padded_n - n))
    x2d = xf.reshape(padded_rows, _LANES)

    w1d = jnp.reshape(weight, (-1,)).astype(jnp.float32)   # [1]
    b1d = jnp.reshape(bias, (-1,)).astype(jnp.float32)     # [1]

    grid = (padded_rows // tr,)
    out2d = pl.pallas_call(
        _logreg_kernel,
        out_shape=jax.ShapeDtypeStruct((padded_rows, _LANES), jnp.float32),
        grid=grid,
        in_specs=[
            pl.BlockSpec(memory_space=pltpu.MemorySpace.SMEM),   # weight scalar
            pl.BlockSpec(memory_space=pltpu.MemorySpace.SMEM),   # bias scalar
            pl.BlockSpec((tr, _LANES), lambda i: (i, 0)),        # x tile
        ],
        out_specs=pl.BlockSpec((tr, _LANES), lambda i: (i, 0)),
        compiler_params=pltpu.CompilerParams(
            dimension_semantics=("parallel",)),
    )(w1d, b1d, x2d)

    out = out2d.reshape(-1)[:n].reshape(orig_shape)
    return out.astype(orig_dtype)


if __name__ == "__main__":
    key = jax.random.PRNGKey(0)
    kx, kw, kb, kx2 = jax.random.split(key, 4)

    # PyTorch-like init for Linear(1, 1): U(-1/sqrt(in), 1/sqrt(in)), in = 1.
    weight = jax.random.uniform(kw, (1, 1), jnp.float32, minval=-1.0, maxval=1.0)
    bias = jax.random.uniform(kb, (1,), jnp.float32, minval=-1.0, maxval=1.0)

    # Small batch of scalar features, consistent with Linear(1, 1): x is [N, 1].
    x = jax.random.normal(kx, (8, 1), jnp.float32)
    out = jax.block_until_ready(logistic_regression(x, weight, bias))
    ref = jax.nn.sigmoid(x @ weight.T + bias)
    assert out.shape == x.shape
    assert jnp.allclose(out, ref, atol=1e-6), "mismatch vs reference (small)"

    # Second check: N not tile-aligned -> exercises padding + multi-tile grid.
    x2 = jax.random.normal(kx2, (5000, 1), jnp.float32)
    out2 = jax.block_until_ready(
        logistic_regression(x2, weight, bias, tile_rows=8))
    ref2 = jax.nn.sigmoid(x2 @ weight.T + bias)
    assert out2.shape == x2.shape
    assert jnp.allclose(out2, ref2, atol=1e-6), "mismatch vs reference (tiled)"

    print("KERNEL_OK")
</pallas_src>

<mosaic_0001>
module attributes {stable_mosaic.version = 11 : i64} {
  func.func @_logreg_kernel(%arg0: i32, %arg1: memref<1xf32, #tpu.memory_space<smem>>, %arg2: memref<1xf32, #tpu.memory_space<smem>>, %arg3: memref<8x512xf32, #tpu.memory_space<vmem>>, %arg4: memref<8x512xf32, #tpu.memory_space<vmem>>) attributes {dimension_semantics = [#tpu.dimension_semantics<parallel>], iteration_bounds = array<i64: 1>, scalar_prefetch = 0 : i64, scratch_operands = 0 : i64, tpu.core_type = #tpu.core_type<tc>, window_params = [{transform_indices = @transform_0, window_bounds = array<i64: 1>}, {transform_indices = @transform_1, window_bounds = array<i64: 1>}, {transform_indices = @transform_2, window_bounds = array<i64: 8, 512>}, {transform_indices = @transform_3, window_bounds = array<i64: 8, 512>}]} {
    %c0 = arith.constant 0 : index
    %0 = memref.load %arg1[%c0] : memref<1xf32, #tpu.memory_space<smem>>
    %c0_0 = arith.constant 0 : index
    %1 = memref.load %arg2[%c0_0] : memref<1xf32, #tpu.memory_space<smem>>
    %c0_1 = arith.constant 0 : index
    %c0_2 = arith.constant 0 : index
    %2 = vector.load %arg3[%c0_1, %c0_2] : memref<8x512xf32, #tpu.memory_space<vmem>>, vector<8x512xf32>
    %3 = vector.broadcast %0 : f32 to vector<8x512xf32>
    %4 = arith.mulf %2, %3 : vector<8x512xf32>
    %5 = vector.broadcast %1 : f32 to vector<8x512xf32>
    %6 = arith.addf %4, %5 : vector<8x512xf32>
    %7 = arith.negf %6 : vector<8x512xf32>
    %8 = math.exp %7 : vector<8x512xf32>
    %cst = arith.constant 1.000000e+00 : f32
    %9 = vector.broadcast %cst : f32 to vector<8x512xf32>
    %10 = arith.addf %9, %8 : vector<8x512xf32>
    %11 = arith.divf %9, %10 : vector<8x512xf32>
    %c0_3 = arith.constant 0 : index
    %c0_4 = arith.constant 0 : index
    %12 = vector.load %arg4[%c0_3, %c0_4] : memref<8x512xf32, #tpu.memory_space<vmem>>, vector<8x512xf32>
    tpu.vector_store %arg4[%c0_3, %c0_4], %11 {strides = array<i32>} : memref<8x512xf32, #tpu.memory_space<vmem>>, vector<8x512xf32>,
    return
  }
  func.func @transform_0(%arg0: i32) -> i32 {
    %c0_i32 = arith.constant 0 : i32
    %c0_i32_0 = arith.constant 0 : i32
    return %c0_i32 : i32
  }
  func.func @transform_1(%arg0: i32) -> i32 {
    %c0_i32 = arith.constant 0 : i32
    %c0_i32_0 = arith.constant 0 : i32
    return %c0_i32 : i32
  }
  func.func @transform_2(%arg0: i32) -> (i32, i32) {
    %c0_i32 = arith.constant 0 : i32
    %c0_i32_0 = arith.constant 0 : i32
    return %arg0, %c0_i32 : i32, i32
  }
  func.func @transform_3(%arg0: i32) -> (i32, i32) {
    %c0_i32 = arith.constant 0 : i32
    %c0_i32_0 = arith.constant 0 : i32
    return %arg0, %c0_i32 : i32, i32
  }
}

</mosaic_0001>

<llo_original>
// kernel: tpu_custom_call.1
$region0: #{tpu_custom_call.1}
  #allocation0 [shape = 'u32[]', space=smem, size = 0x4, offset = 0x4, fixed_abs, tag = 'smem constant byte address 0x4 - core index']
  #allocation1 [shape = 'u32[144,128]{1,0:T(1,128)}', space=vmem, size = 0x12000, scoped, tag = 'internal scratch']
  #allocation2 [shape = 'f32[1]{0:T(128)S(6)}', space=smem, size = 0x200, scoped, tag = 'scoped memory for tpu_custom_call.1']
  #allocation3 [shape = 'f32[1]{0:T(128)S(6)}', space=smem, size = 0x200, scoped, tag = 'scoped memory for tpu_custom_call.1']
  %s0 = inlined_call_operand.<no memory space> [shape: f32[1], index: 0, kind: input, shape index: {}]
  %s1 = inlined_call_operand.<no memory space> [shape: f32[1], index: 1, kind: input, shape index: {}]
  %s2 = inlined_call_operand.hbm [shape: f32[8,512], index: 2, kind: input, shape index: {}]
  %s3 = inlined_call_operand.hbm [shape: f32[8,512], index: 3, kind: output, shape index: {}]
  %s4 = sld [smem:[#allocation0]]
  $region26: #{tpu_custom_call.1} parent=0
    _
  %s6 = ssub.s32 1, %s4
  %s7 = scalar_select 0, %s6, %s4
  %8 = sst [smem:[#allocation2]] %s0
  %9 = sst [smem:[#allocation3]] %s1
  $region1: #{tpu_custom_call.1} parent=0
    #allocation4 [shape = 'u8[16384]{0}', space=vmem, size = 0x4000, scoped, tag = 'input window, operand 2, single buffered']
    #allocation5 [shape = 's32[1]{0}', space=sflag, size = 0x4, scoped, tag = 'scoped memory for tpu_custom_call.1']
    #allocation6 [shape = 's32[1]{0}', space=sflag, size = 0x4, scoped, tag = 'scoped memory for tpu_custom_call.1']
    #allocation7 [shape = 'u8[16384]{0}', space=vmem, size = 0x4000, scoped, tag = 'output window, operand 0, single buffered']
    %10 = vsyncpa [#allocation5], 0
    %11 = vsyncpa [#allocation6], 0
    // Predicated region
    $region2: #{tpu_custom_call.1} parent=1 // pred_check
      _
    $region3: #{tpu_custom_call.1} parent=1 // pred_check_branch
      %13 = sbr.rel (0) target = $region5
    $region4: #{tpu_custom_call.1} parent=1 // pred_region
      _
    $region5: #{tpu_custom_call.1} parent=1 // pred_fallthru
      _
    // Predicated region
    $region6: #{tpu_custom_call.1} parent=1 // pred_check
      _
    $region7: #{tpu_custom_call.1} parent=1 // pred_check_branch
      %15 = sbr.rel (0) target = $region9
    $region8: #{tpu_custom_call.1} parent=1 // pred_region
      _
    $region9: #{tpu_custom_call.1} parent=1 // pred_fallthru
      _
    // Predicated region
    $region10: #{tpu_custom_call.1} parent=1 // pred_check
      _
    $region11: #{tpu_custom_call.1} parent=1 // pred_check_branch
      %17 = sbr.rel (0) target = $region13
    $region12: #{tpu_custom_call.1} parent=1 // pred_region
      %s19 = ssub.s32 512, 512
      %20 = vsyncadd [#allocation5], %s19
      %s22 = sshll.u32 [#allocation4], 4
      %s23 = int_to_ptr.vmem [resolvable:$true] %s22
      %25 = dma.hbm_to_vmem [thread:$0]  %s2, 512, %s23, [#allocation5]
    $region13: #{tpu_custom_call.1} parent=1 // pred_fallthru
      _
    // Predicated region
    $region14: #{tpu_custom_call.1} parent=1 // pred_check
      _
    $region15: #{tpu_custom_call.1} parent=1 // pred_check_branch
      %27 = sbr.rel (0) target = $region17
    $region16: #{tpu_custom_call.1} parent=1 // pred_region
      %28 = dma.done [#allocation5], 512
    $region17: #{tpu_custom_call.1} parent=1 // pred_fallthru
      _
    %s29 = sld [smem:[#allocation2]]
    %s30 = sld [smem:[#allocation3]]
    %v31 = vld [vmem:[#allocation4] sm:$0xff]
    %v32 = vld [vmem:[#allocation4 + $0x8] sm:$0xff]
    %v33 = vld [vmem:[#allocation4 + $0x10] sm:$0xff]
    %v34 = vld [vmem:[#allocation4 + $0x18] sm:$0xff]
    %v35 = vstv %s29
    %v36 = vmul.f32 %v31, %v35
    %v37 = vmul.f32 %v32, %v35
    %v38 = vmul.f32 %v33, %v35
    %v39 = vmul.f32 %v34, %v35
    %v40 = vstv %s30
    %v41 = vadd.f32 %v36, %v40
    %v42 = vadd.f32 %v37, %v40
    %v43 = vadd.f32 %v38, %v40
    %v44 = vadd.f32 %v39, %v40
    %v45 = vxor.u32 %v41, 2147483648
    %v46 = vxor.u32 %v42, 2147483648
    %v47 = vxor.u32 %v43, 2147483648
    %v48 = vxor.u32 %v44, 2147483648
    %v49 = vmul.f32 %v45, 1.442695
    %v50 = vpow.pop %v49
    %v51 = vmul.f32 %v46, 1.442695
    %v52 = vpow.pop %v51
    %v53 = vmul.f32 %v47, 1.442695
    %v54 = vpow.pop %v53
    %v55 = vmul.f32 %v48, 1.442695
    %v56 = vpow.pop %v55
    %v57 = vadd.f32 %v50, 1.0
    %v58 = vadd.f32 %v52, 1.0
    %v59 = vadd.f32 %v54, 1.0
    %v60 = vadd.f32 %v56, 1.0
    %v61 = vrcp.pop %v57
    %v62 = vmul.f32 1.0, %v61
    %v63 = vrcp.pop %v58
    %v64 = vmul.f32 1.0, %v63
    %v65 = vrcp.pop %v59
    %v66 = vmul.f32 1.0, %v65
    %v67 = vrcp.pop %v60
    %v68 = vmul.f32 1.0, %v67
    %69 = vst [vmem:[#allocation7] sm:$0xff] %v62
    %70 = vst [vmem:[#allocation7 + $0x8] sm:$0xff] %v64
    %71 = vst [vmem:[#allocation7 + $0x10] sm:$0xff] %v66
    %72 = vst [vmem:[#allocation7 + $0x18] sm:$0xff] %v68
    // Predicated region
    $region18: #{tpu_custom_call.1} parent=1 // pred_check
      _
    $region19: #{tpu_custom_call.1} parent=1 // pred_check_branch
      %74 = sbr.rel (0) target = $region21
    $region20: #{tpu_custom_call.1} parent=1 // pred_region
      %s76 = ssub.s32 512, 512
      %77 = vsyncadd [#allocation6], %s76
      %s79 = sshll.u32 [#allocation7], 4
      %s80 = int_to_ptr.vmem [resolvable:$true] %s79
      %82 = dma.vmem_to_hbm [thread:$0]  %s80, 512, %s3, [#allocation6]
    $region21: #{tpu_custom_call.1} parent=1 // pred_fallthru
      _
    // Predicated region
    $region22: #{tpu_custom_call.1} parent=1 // pred_check
      _
    $region23: #{tpu_custom_call.1} parent=1 // pred_check_branch
      %84 = sbr.rel (0) target = $region25
    $region24: #{tpu_custom_call.1} parent=1 // pred_region
      %85 = dma.done [#allocation6], 512
    $region25: #{tpu_custom_call.1} parent=1 // pred_fallthru
      _
    %86 = vsyncpa [#allocation5], 1
    %87 = vsyncpa [#allocation6], 1

</llo_original>
